<compile_context>
chip_gen: v5e
topology: v5e:2x2
jax: 0.10.0
libtpu: 0.0.40
codegen_flags: <defaults>
</compile_context>

<pallas_src>
import functools

import jax
import jax.numpy as jnp
from jax import lax
from jax.experimental import pallas as pl
from jax.experimental.pallas import tpu as pltpu


def _vmem():
    return pl.BlockSpec(memory_space=pltpu.MemorySpace.VMEM)


_COMPILER_PARAMS = pltpu.CompilerParams(
    dimension_semantics=("parallel",),          # batch grid axis -> megacore split
    vmem_limit_bytes=32 * 1024 * 1024,
)


# --------------------------------------------------------------------------
# Kernel 1: fused Conv1d(k=3, pad=1)+ReLU -> Conv1d(k=3, pad=1)+ReLU.
# One grid step = one batch element.  Each conv = ONE MXU matmul over an
# im2col scratch built with static sublane/lane-offset stores; the zero
# "same" padding is realised by zero-filling the scratch (no HBM pad copy).
# --------------------------------------------------------------------------
def _conv_block_kernel(x_ref, w1_ref, b1_ref, w2_ref, b2_ref, o_ref,
                       lhs1_sc, lhs2_sc, *, T, K):
    pad = (K - 1) // 2

    def im2col_matmul_relu(src, lhs_sc, w_ref, b_ref):
        # src: (T, Cin) f32 value; lhs_sc: (T, K*Cin) f32 scratch.
        cin = src.shape[-1]
        lhs_sc[...] = jnp.zeros_like(lhs_sc)    # halo rows -> zeros ("same" pad)
        for k in range(K):                      # static unroll, static slices
            shift = k - pad
            n = T - abs(shift)
            src_lo = max(0, shift)
            dst_lo = max(0, -shift)
            lhs_sc[dst_lo:dst_lo + n, k * cin:(k + 1) * cin] = (
                src[src_lo:src_lo + n, :])
        acc = jnp.dot(lhs_sc[...].astype(jnp.bfloat16), w_ref[...],
                      preferred_element_type=jnp.float32)
        return jnp.maximum(acc + b_ref[...], 0.0)

    h1 = im2col_matmul_relu(x_ref[0], lhs1_sc, w1_ref, b1_ref)   # (T, 64)
    h2 = im2col_matmul_relu(h1, lhs2_sc, w2_ref, b2_ref)         # (T, 128)
    o_ref[0] = h2.astype(o_ref.dtype)


def conv_block(x, p):
    B, T, Cin = x.shape
    K, _, C1 = p["conv1_w"].shape
    C2 = p["conv2_w"].shape[2]
    # flatten (K, Cin, Cout) -> (K*Cin, Cout) to match the im2col row layout
    w1 = p["conv1_w"].reshape(K * Cin, C1).astype(jnp.bfloat16)
    w2 = p["conv2_w"].reshape(K * C1, C2).astype(jnp.bfloat16)
    return pl.pallas_call(
        functools.partial(_conv_block_kernel, T=T, K=K),
        grid=(B,),
        in_specs=[pl.BlockSpec((1, T, Cin), lambda b: (b, 0, 0))]
                 + [_vmem() for _ in range(4)],
        out_specs=pl.BlockSpec((1, T, C2), lambda b: (b, 0, 0)),
        out_shape=jax.ShapeDtypeStruct((B, T, C2), jnp.float32),
        scratch_shapes=[pltpu.VMEM((T, K * Cin), jnp.float32),
                        pltpu.VMEM((T, K * C1), jnp.float32)],
        compiler_params=_COMPILER_PARAMS,
    )(x, w1, p["conv1_b"], w2, p["conv2_b"])


# --------------------------------------------------------------------------
# Kernel 2: fused 2-layer LSTM + fc.  One grid step = one batch block (bb).
# Per layer: input projection as one (T*bb, D)@(D, 4H) matmul -> time-major
# VMEM scratch; recurrence reads xg_sc rows / writes h_sc rows (VMEM only);
# fc is a single (T*bb, H)@(H, O) epilogue matmul with one final store.
# --------------------------------------------------------------------------
def _lstm_fc_kernel(x_ref, wih0_ref, whh0_ref, b0_ref,
                    wih1_ref, whh1_ref, b1_ref, wfc_ref, bfc_ref,
                    o_ref, xg_sc, h_sc, *, T, H, bb):

    def run_layer(inp_tm, wih_ref, whh_ref, b_ref):
        # inp_tm: (T*bb, D) bf16, time-major flattened (row = t*bb + b).
        xg = jnp.dot(inp_tm, wih_ref[...],
                     preferred_element_type=jnp.float32) + b_ref[...]
        xg_sc[...] = xg                          # stage all-timestep gates in VMEM
        # Loop-invariant recurrent weight, loaded once; Mosaic keeps it staged
        # for the per-step MXU pushes (explicit matmul_push_rhs not needed here).
        whh = whh_ref[...]                       # (H, 4H) bf16

        def step(t, carry):
            h, c = carry                         # (bb, H) f32
            g = xg_sc[pl.ds(t * bb, bb), :] + jnp.dot(
                h.astype(jnp.bfloat16), whh, preferred_element_type=jnp.float32)
            i_g = jax.nn.sigmoid(g[:, 0 * H:1 * H])
            f_g = jax.nn.sigmoid(g[:, 1 * H:2 * H])
            g_g = jnp.tanh(g[:, 2 * H:3 * H])
            o_g = jax.nn.sigmoid(g[:, 3 * H:4 * H])
            c = f_g * c + i_g * g_g
            h = o_g * jnp.tanh(c)
            h_sc[pl.ds(t * bb, bb), :] = h       # VMEM staging, not HBM
            return h, c

        carry = (jnp.zeros((bb, H), jnp.float32),
                 jnp.zeros((bb, H), jnp.float32))
        if T <= 128:                             # fully unroll short recurrences
            for t in range(T):
                carry = step(t, carry)
        else:
            lax.fori_loop(0, T, step, carry, unroll=8)

    D = x_ref.shape[-1]
    # ---- LSTM layer 0 ----
    if bb == 1:
        x_tm = x_ref[0].astype(jnp.bfloat16)                       # (T, D)
    else:
        x_tm = jnp.swapaxes(x_ref[...], 0, 1).reshape(T * bb, D).astype(jnp.bfloat16)
    run_layer(x_tm, wih0_ref, whh0_ref, b0_ref)

    # ---- LSTM layer 1 (input = layer-0 hidden states, already time-major) ----
    h0_tm = h_sc[...].astype(jnp.bfloat16)                         # (T*bb, H)
    run_layer(h0_tm, wih1_ref, whh1_ref, b1_ref)

    # ---- fc epilogue, fused: one matmul over every timestep, one store ----
    h1_tm = h_sc[...].astype(jnp.bfloat16)                         # (T*bb, H)
    y = jnp.dot(h1_tm, wfc_ref[...],
                preferred_element_type=jnp.float32) + bfc_ref[...]  # (T*bb, O)
    if bb == 1:
        o_ref[0] = y.astype(o_ref.dtype)
    else:
        o_ref[...] = jnp.swapaxes(
            y.reshape(T, bb, y.shape[-1]), 0, 1).astype(o_ref.dtype)


def lstm_fc_block(x, p, *, batch_block=1):
    B, T, D = x.shape
    H = p["lstm0_whh"].shape[0]
    O = p["fc_w"].shape[1]
    bb = batch_block
    assert B % bb == 0
    bf16 = lambda a: a.astype(jnp.bfloat16)
    return pl.pallas_call(
        functools.partial(_lstm_fc_kernel, T=T, H=H, bb=bb),
        grid=(B // bb,),
        in_specs=[pl.BlockSpec((bb, T, D), lambda i: (i, 0, 0))]
                 + [_vmem() for _ in range(8)],
        out_specs=pl.BlockSpec((bb, T, O), lambda i: (i, 0, 0)),
        out_shape=jax.ShapeDtypeStruct((B, T, O), jnp.float32),
        scratch_shapes=[pltpu.VMEM((T * bb, 4 * H), jnp.float32),   # xg (time-major)
                        pltpu.VMEM((T * bb, H), jnp.float32)],      # h   (time-major)
        compiler_params=_COMPILER_PARAMS,
    )(x, bf16(p["lstm0_wih"]), bf16(p["lstm0_whh"]), p["lstm0_b"],
      bf16(p["lstm1_wih"]), bf16(p["lstm1_whh"]), p["lstm1_b"],
      bf16(p["fc_w"]), p["fc_b"])


# --------------------------------------------------------------------------
# Full model forward: two fused Pallas kernels.
# --------------------------------------------------------------------------
def cnn_lstm_forward(x, p):
    h = conv_block(x, p)            # (B, T, 128)
    return lstm_fc_block(h, p)      # (B, T, output_size)


# --------------------------------------------------------------------------
# Pure-JAX reference (same bf16-input / f32-accum matmul convention).
# --------------------------------------------------------------------------
def _ref_conv(x, w, b):
    B, T, Cin = x.shape
    K, _, Cout = w.shape
    pad = (K - 1) // 2
    xp = jnp.pad(x, ((0, 0), (pad, pad), (0, 0)))
    lhs = jnp.concatenate([xp[:, k:k + T, :] for k in range(K)], axis=-1)
    y = jnp.einsum("btc,cd->btd", lhs.astype(jnp.bfloat16),
                   w.reshape(K * Cin, Cout).astype(jnp.bfloat16),
                   preferred_element_type=jnp.float32)
    return jax.nn.relu(y + b[None])


def _ref_lstm(x, w_ih, w_hh, b):
    B, T, _ = x.shape
    H = w_hh.shape[0]
    xg = jnp.einsum("btd,dg->btg", x.astype(jnp.bfloat16),
                    w_ih.astype(jnp.bfloat16),
                    preferred_element_type=jnp.float32) + b[None]
    whh = w_hh.astype(jnp.bfloat16)

    def step(carry, g_t):
        h, c = carry
        g = g_t + jnp.dot(h.astype(jnp.bfloat16), whh,
                          preferred_element_type=jnp.float32)
        i = jax.nn.sigmoid(g[:, :H])
        f = jax.nn.sigmoid(g[:, H:2 * H])
        gg = jnp.tanh(g[:, 2 * H:3 * H])
        o = jax.nn.sigmoid(g[:, 3 * H:])
        c = f * c + i * gg
        h = o * jnp.tanh(c)
        return (h, c), h

    init = (jnp.zeros((B, H), jnp.float32), jnp.zeros((B, H), jnp.float32))
    _, ys = lax.scan(step, init, jnp.swapaxes(xg, 0, 1))
    return jnp.swapaxes(ys, 0, 1)


def cnn_lstm_reference(x, p):
    h = _ref_conv(x, p["conv1_w"], p["conv1_b"])
    h = _ref_conv(h, p["conv2_w"], p["conv2_b"])
    h = _ref_lstm(h, p["lstm0_wih"], p["lstm0_whh"], p["lstm0_b"])
    h = _ref_lstm(h, p["lstm1_wih"], p["lstm1_whh"], p["lstm1_b"])
    y = jnp.einsum("bth,ho->bto", h.astype(jnp.bfloat16),
                   p["fc_w"].astype(jnp.bfloat16),
                   preferred_element_type=jnp.float32)
    return y + p["fc_b"][None]


def init_params(key, input_size, hidden_size, output_size):
    ks = jax.random.split(key, 12)
    u = lambda k, shape, s: jax.random.uniform(k, shape, jnp.float32, -s, s)
    return {
        # conv1: Conv1d(input_size, 64, k=3, pad=1)
        "conv1_w": u(ks[0], (3, input_size, 64), 0.2),
        "conv1_b": u(ks[1], (1, 64), 0.2),
        # conv2: Conv1d(64, 128, k=3, pad=1)
        "conv2_w": u(ks[2], (3, 64, 128), 0.1),
        "conv2_b": u(ks[3], (1, 128), 0.1),
        # LSTM layer 0: input 128 -> hidden H, gate order [i, f, g, o], bias = b_ih+b_hh
        "lstm0_wih": u(ks[4], (128, 4 * hidden_size), 0.1),
        "lstm0_whh": u(ks[5], (hidden_size, 4 * hidden_size), 0.1),
        "lstm0_b": u(ks[6], (1, 4 * hidden_size), 0.1),
        # LSTM layer 1: input H -> hidden H
        "lstm1_wih": u(ks[7], (hidden_size, 4 * hidden_size), 0.1),
        "lstm1_whh": u(ks[8], (hidden_size, 4 * hidden_size), 0.1),
        "lstm1_b": u(ks[9], (1, 4 * hidden_size), 0.1),
        # fc: Linear(H, output_size)
        "fc_w": u(ks[10], (hidden_size, output_size), 0.2),
        "fc_b": u(ks[11], (1, output_size), 0.2),
    }


if __name__ == "__main__":
    # x: (batch, seq_len, input_size) -> out: (batch, seq_len, output_size)
    # hidden_size=128 matches the PyTorch spec (and is lane-aligned).
    B, T, input_size = 2, 8, 4
    hidden_size, output_size = 128, 4

    key = jax.random.PRNGKey(0)
    k_x, k_p = jax.random.split(key)
    x = jax.random.normal(k_x, (B, T, input_size), jnp.float32)
    params = init_params(k_p, input_size, hidden_size, output_size)

    out = jax.block_until_ready(cnn_lstm_forward(x, params))
    assert out.shape == (B, T, output_size), out.shape

    ref = jax.block_until_ready(cnn_lstm_reference(x, params))
    max_err = float(jnp.max(jnp.abs(out - ref)))
    assert jnp.allclose(out, ref, rtol=2e-2, atol=2e-2), max_err

    print("KERNEL_OK")
</pallas_src>

<mosaic_0001>
module attributes {stable_mosaic.version = 11 : i64} {
  func.func @_conv_block_kernel(%arg0: i32, %arg1: memref<1x8x4xf32, #tpu.memory_space<vmem>>, %arg2: memref<12x64xbf16, #tpu.memory_space<vmem>>, %arg3: memref<1x64xf32, #tpu.memory_space<vmem>>, %arg4: memref<192x128xbf16, #tpu.memory_space<vmem>>, %arg5: memref<1x128xf32, #tpu.memory_space<vmem>>, %arg6: memref<1x8x128xf32, #tpu.memory_space<vmem>>, %arg7: memref<8x12xf32, #tpu.memory_space<vmem>>, %arg8: memref<8x192xf32, #tpu.memory_space<vmem>>) attributes {dimension_semantics = [#tpu.dimension_semantics<parallel>], iteration_bounds = array<i64: 2>, scalar_prefetch = 0 : i64, scratch_operands = 2 : i64, tpu.core_type = #tpu.core_type<tc>, window_params = [{transform_indices = @transform_0, window_bounds = array<i64: 1, 8, 4>}, {pipeline_mode = #tpu.pipeline_mode<synchronous>, transform_indices = @transform_1, window_bounds = array<i64: 12, 64>}, {pipeline_mode = #tpu.pipeline_mode<synchronous>, transform_indices = @transform_2, window_bounds = array<i64: 1, 64>}, {pipeline_mode = #tpu.pipeline_mode<synchronous>, transform_indices = @transform_3, window_bounds = array<i64: 192, 128>}, {pipeline_mode = #tpu.pipeline_mode<synchronous>, transform_indices = @transform_4, window_bounds = array<i64: 1, 128>}, {transform_indices = @transform_5, window_bounds = array<i64: 1, 8, 128>}]} {
    %c0 = arith.constant 0 : index
    %c0_0 = arith.constant 0 : index
    %c0_1 = arith.constant 0 : index
    %0 = vector.load %arg1[%c0, %c0_0, %c0_1] : memref<1x8x4xf32, #tpu.memory_space<vmem>>, vector<1x8x4xf32>
    %1 = vector.shape_cast %0 : vector<1x8x4xf32> to vector<8x4xf32>
    %cst = arith.constant 0.000000e+00 : f32
    %2 = vector.broadcast %cst : f32 to vector<8x12xf32>
    %c0_2 = arith.constant 0 : index
    %c0_3 = arith.constant 0 : index
    %3 = vector.load %arg7[%c0_2, %c0_3] : memref<8x12xf32, #tpu.memory_space<vmem>>, vector<8x12xf32>
    tpu.vector_store %arg7[%c0_2, %c0_3], %2 {strides = array<i32>} : memref<8x12xf32, #tpu.memory_space<vmem>>, vector<8x12xf32>,
    %4 = vector.extract_strided_slice %1 {offsets = [0, 0], sizes = [7, 4], strides = [1, 1]} : vector<8x4xf32> to vector<7x4xf32>
    %c1 = arith.constant 1 : index
    %c0_4 = arith.constant 0 : index
    %5 = vector.load %arg7[%c1, %c0_4] : memref<8x12xf32, #tpu.memory_space<vmem>>, vector<7x4xf32>
    tpu.vector_store %arg7[%c1, %c0_4], %4 {strides = array<i32>} : memref<8x12xf32, #tpu.memory_space<vmem>>, vector<7x4xf32>,
    %c0_5 = arith.constant 0 : index
    %c4 = arith.constant 4 : index
    %6 = vector.load %arg7[%c0_5, %c4] : memref<8x12xf32, #tpu.memory_space<vmem>>, vector<8x4xf32>
    tpu.vector_store %arg7[%c0_5, %c4], %1 {strides = array<i32>} : memref<8x12xf32, #tpu.memory_space<vmem>>, vector<8x4xf32>,
    %7 = vector.extract_strided_slice %1 {offsets = [1, 0], sizes = [7, 4], strides = [1, 1]} : vector<8x4xf32> to vector<7x4xf32>
    %c0_6 = arith.constant 0 : index
    %c8 = arith.constant 8 : index
    %8 = vector.load %arg7[%c0_6, %c8] : memref<8x12xf32, #tpu.memory_space<vmem>>, vector<7x4xf32>
    tpu.vector_store %arg7[%c0_6, %c8], %7 {strides = array<i32>} : memref<8x12xf32, #tpu.memory_space<vmem>>, vector<7x4xf32>,
    %c0_7 = arith.constant 0 : index
    %c0_8 = arith.constant 0 : index
    %9 = vector.load %arg7[%c0_7, %c0_8] : memref<8x12xf32, #tpu.memory_space<vmem>>, vector<8x12xf32>
    %10 = arith.truncf %9 : vector<8x12xf32> to vector<8x12xbf16>
    %c0_9 = arith.constant 0 : index
    %c0_10 = arith.constant 0 : index
    %11 = vector.load %arg2[%c0_9, %c0_10] : memref<12x64xbf16, #tpu.memory_space<vmem>>, vector<12x64xbf16>
    %cst_11 = arith.constant dense<0.000000e+00> : vector<8x64xf32>
    %12 = tpu.matmul %10, %11, %cst_11 {dimension_numbers = #tpu.dot_dimension_numbers<[1], [0], [0], [1], [0, 0, 1, 1], [], []>} : vector<8x12xbf16>, vector<12x64xbf16>, vector<8x64xf32> -> vector<8x64xf32>
    %c0_12 = arith.constant 0 : index
    %c0_13 = arith.constant 0 : index
    %13 = vector.load %arg3[%c0_12, %c0_13] : memref<1x64xf32, #tpu.memory_space<vmem>>, vector<1x64xf32>
    %14 = vector.broadcast %13 : vector<1x64xf32> to vector<8x64xf32>
    %15 = arith.addf %12, %14 : vector<8x64xf32>
    %cst_14 = arith.constant 0.000000e+00 : f32
    %16 = vector.broadcast %cst_14 : f32 to vector<8x64xf32>
    %17 = arith.maximumf %15, %16 : vector<8x64xf32>
    %cst_15 = arith.constant 0.000000e+00 : f32
    %18 = vector.broadcast %cst_15 : f32 to vector<8x192xf32>
    %c0_16 = arith.constant 0 : index
    %c0_17 = arith.constant 0 : index
    %19 = vector.load %arg8[%c0_16, %c0_17] : memref<8x192xf32, #tpu.memory_space<vmem>>, vector<8x192xf32>
    tpu.vector_store %arg8[%c0_16, %c0_17], %18 {strides = array<i32>} : memref<8x192xf32, #tpu.memory_space<vmem>>, vector<8x192xf32>,
    %20 = vector.extract_strided_slice %17 {offsets = [0, 0], sizes = [7, 64], strides = [1, 1]} : vector<8x64xf32> to vector<7x64xf32>
    %c1_18 = arith.constant 1 : index
    %c0_19 = arith.constant 0 : index
    %21 = vector.load %arg8[%c1_18, %c0_19] : memref<8x192xf32, #tpu.memory_space<vmem>>, vector<7x64xf32>
    tpu.vector_store %arg8[%c1_18, %c0_19], %20 {strides = array<i32>} : memref<8x192xf32, #tpu.memory_space<vmem>>, vector<7x64xf32>,
    %c0_20 = arith.constant 0 : index
    %c64 = arith.constant 64 : index
    %22 = vector.load %arg8[%c0_20, %c64] : memref<8x192xf32, #tpu.memory_space<vmem>>, vector<8x64xf32>
    tpu.vector_store %arg8[%c0_20, %c64], %17 {strides = array<i32>} : memref<8x192xf32, #tpu.memory_space<vmem>>, vector<8x64xf32>,
    %23 = vector.extract_strided_slice %17 {offsets = [1, 0], sizes = [7, 64], strides = [1, 1]} : vector<8x64xf32> to vector<7x64xf32>
    %c0_21 = arith.constant 0 : index
    %c128 = arith.constant 128 : index
    %24 = vector.load %arg8[%c0_21, %c128] : memref<8x192xf32, #tpu.memory_space<vmem>>, vector<7x64xf32>
    tpu.vector_store %arg8[%c0_21, %c128], %23 {strides = array<i32>} : memref<8x192xf32, #tpu.memory_space<vmem>>, vector<7x64xf32>,
    %c0_22 = arith.constant 0 : index
    %c0_23 = arith.constant 0 : index
    %25 = vector.load %arg8[%c0_22, %c0_23] : memref<8x192xf32, #tpu.memory_space<vmem>>, vector<8x192xf32>
    %26 = arith.truncf %25 : vector<8x192xf32> to vector<8x192xbf16>
    %c0_24 = arith.constant 0 : index
    %c0_25 = arith.constant 0 : index
    %27 = vector.load %arg4[%c0_24, %c0_25] : memref<192x128xbf16, #tpu.memory_space<vmem>>, vector<192x128xbf16>
    %cst_26 = arith.constant dense<0.000000e+00> : vector<8x128xf32>
    %28 = tpu.matmul %26, %27, %cst_26 {dimension_numbers = #tpu.dot_dimension_numbers<[1], [0], [0], [1], [0, 0, 1, 1], [], []>} : vector<8x192xbf16>, vector<192x128xbf16>, vector<8x128xf32> -> vector<8x128xf32>
    %c0_27 = arith.constant 0 : index
    %c0_28 = arith.constant 0 : index
    %29 = vector.load %arg5[%c0_27, %c0_28] : memref<1x128xf32, #tpu.memory_space<vmem>>, vector<1x128xf32>
    %30 = vector.broadcast %29 : vector<1x128xf32> to vector<8x128xf32>
    %31 = arith.addf %28, %30 : vector<8x128xf32>
    %cst_29 = arith.constant 0.000000e+00 : f32
    %32 = vector.broadcast %cst_29 : f32 to vector<8x128xf32>
    %33 = arith.maximumf %31, %32 : vector<8x128xf32>
    %c0_30 = arith.constant 0 : index
    %c0_31 = arith.constant 0 : index
    %c0_32 = arith.constant 0 : index
    %34 = vector.load %arg6[%c0_30, %c0_31, %c0_32] : memref<1x8x128xf32, #tpu.memory_space<vmem>>, vector<1x8x128xf32>
    %35 = vector.shape_cast %34 : vector<1x8x128xf32> to vector<8x128xf32>
    %36 = vector.shape_cast %33 : vector<8x128xf32> to vector<1x8x128xf32>
    tpu.vector_store %arg6[%c0_30, %c0_31, %c0_32], %36 {strides = array<i32>} : memref<1x8x128xf32, #tpu.memory_space<vmem>>, vector<1x8x128xf32>,
    return
  }
  func.func @transform_0(%arg0: i32) -> (i32, i32, i32) {
    %c0_i32 = arith.constant 0 : i32
    %c0_i32_0 = arith.constant 0 : i32
    %c0_i32_1 = arith.constant 0 : i32
    return %arg0, %c0_i32, %c0_i32_0 : i32, i32, i32
  }
  func.func @transform_1(%arg0: i32) -> (i32, i32) {
    %c0_i32 = arith.constant 0 : i32
    %c0_i32_0 = arith.constant 0 : i32
    %c0_i32_1 = arith.constant 0 : i32
    return %c0_i32, %c0_i32_0 : i32, i32
  }
  func.func @transform_2(%arg0: i32) -> (i32, i32) {
    %c0_i32 = arith.constant 0 : i32
    %c0_i32_0 = arith.constant 0 : i32
    %c0_i32_1 = arith.constant 0 : i32
    return %c0_i32, %c0_i32_0 : i32, i32
  }
  func.func @transform_3(%arg0: i32) -> (i32, i32) {
    %c0_i32 = arith.constant 0 : i32
    %c0_i32_0 = arith.constant 0 : i32
    %c0_i32_1 = arith.constant 0 : i32
    return %c0_i32, %c0_i32_0 : i32, i32
  }
  func.func @transform_4(%arg0: i32) -> (i32, i32) {
    %c0_i32 = arith.constant 0 : i32
    %c0_i32_0 = arith.constant 0 : i32
    %c0_i32_1 = arith.constant 0 : i32
    return %c0_i32, %c0_i32_0 : i32, i32
  }
  func.func @transform_5(%arg0: i32) -> (i32, i32, i32) {
    %c0_i32 = arith.constant 0 : i32
    %c0_i32_0 = arith.constant 0 : i32
    %c0_i32_1 = arith.constant 0 : i32
    return %arg0, %c0_i32, %c0_i32_0 : i32, i32, i32
  }
}

</mosaic_0001>

<llo_original>
// kernel: tpu_custom_call.1
$region0: #{tpu_custom_call.1}
  #allocation0 [shape = 'u32[]', space=smem, size = 0x4, offset = 0x4, fixed_abs, tag = 'smem constant byte address 0x4 - core index']
  #allocation1 [shape = 'u32[72,128]{1,0:T(1,128)}', space=vmem, size = 0x9000, scoped, tag = 'internal scratch']
  #allocation2 [shape = 'f32[8,12]{1,0:T(8,128)}', space=vmem, size = 0x1000, scoped, tag = 'scratch operand']
  #allocation3 [shape = 'f32[8,192]{1,0:T(8,128)}', space=vmem, size = 0x2000, scoped, tag = 'scratch operand']
  %s0 = inlined_call_operand.vmem [shape: f32[2,8,4], index: 0, kind: input, shape index: {}]
  %s1 = inlined_call_operand.vmem [shape: bf16[12,64], index: 1, kind: input, shape index: {}]
  %s2 = inlined_call_operand.vmem [shape: f32[1,64], index: 2, kind: input, shape index: {}]
  %s3 = inlined_call_operand.hbm [shape: bf16[192,128], index: 3, kind: input, shape index: {}]
  %s4 = inlined_call_operand.vmem [shape: f32[1,128], index: 4, kind: input, shape index: {}]
  %s5 = inlined_call_operand.hbm [shape: f32[2,8,128], index: 5, kind: output, shape index: {}]
  %s6 = sld [smem:[#allocation0]]
  $region57: #{tpu_custom_call.1} parent=0
    _
  %s8 = ssub.s32 1, %s6
  %s9 = scalar_select 0, %s8, %s6
  $region1: #{tpu_custom_call.1} parent=0
    #allocation4 [shape = 'u8[49152]{0}', space=vmem, size = 0xc000, scoped, tag = 'input window, operand 3, single buffered']
    #allocation5 [shape = 's32[2]{0}', space=sflag, size = 0x8, scoped, tag = 'scoped memory for tpu_custom_call.1']
    #allocation6 [shape = 's32[2]{0}', space=sflag, size = 0x8, scoped, tag = 'scoped memory for tpu_custom_call.1']
    #allocation7 [shape = 'u8[8192]{0}', space=vmem, size = 0x2000, scoped, tag = 'output window, operand 0']
    %10 = vsyncpa [#allocation5], 0
    %11 = vsyncpa [#allocation6], 0
    %s12 = scalar_lea.sflag [#allocation6], 1
    %13 = vsyncpa %s12, 0
    loop: start=0, step=1, limit=4
    $region2: #{tpu_custom_call.1} parent=1 // loop_pre_header
      _
    $region3: #{tpu_custom_call.1} parent=1 // loop_header
      %s15 = sphi 0, %s19
      %p16 = scmp.ge.s32.totalorder %s15, 4
      %s25 = sphi 0, %s27
      %s28 = sphi 0, %s25
      %s29 = sphi 0, %s28
      %s45 = sphi 0, %s29
      %s49 = sphi 0, %s49
      %s51 = sphi 0, %s49
      %s52 = sphi 0, %s51
      %s66 = sphi 0, %s52
      %s70 = sphi 0, %s70
      %s72 = sphi 0, %s70
      %s73 = sphi 0, %s72
      %s87 = sphi 0, %s73
      %s91 = sphi 0, %s91
      %s93 = sphi 0, %s91
      %s94 = sphi 0, %s93
      %s108 = sphi 0, %s94
      %s112 = sphi 0, %s112
      %s114 = sphi 0, %s112
      %s115 = sphi 0, %s114
      %s129 = sphi 0, %s115
      %s135 = sphi 0, %s137
      %s138 = sphi 0, %s135
      %s139 = sphi 0, %s138
      %s155 = sphi 0, %s139
    $region4: #{tpu_custom_call.1} parent=1 // loop_header_branch
      %18 = sbr.rel (%p16) target = $region8
    $region5: #{tpu_custom_call.1} parent=1 // loop_body
      %s20 = ssub.s32 %s15, 1
      %s21 = ssub.s32 %s15, 2
      %s22 = sadd.s32 %s15, 1
      %s23 = ssub.s32 %s15, %s22
      %p24 = scmp.eq.s32.totalorder %s23, 0
      %s26 = sadd.s32 %s25, 1
      %s27 = scalar_select %p24, %s25, %s26
      %p30 = pneg %p24
      %p31 = scmp.eq.s32.totalorder %s15, 1
      %p32 = por %p30, %p31
      %p33 = scmp.ne.s32.totalorder %s25, %s28
      %p34 = scmp.eq.s32.totalorder %s15, 0
      %p35 = por %p33, %p34
      %p36 = scmp.ne.s32.totalorder %s25, %s28
      %p37 = scmp.eq.s32.totalorder %s20, 1
      %p38 = por %p36, %p37
      %p39 = scmp.ne.s32.totalorder %s28, %s29
      %p40 = scmp.eq.s32.totalorder %s20, 0
      %p41 = por %p39, %p40
      %p42 = scmp.ne.s32.totalorder %s28, %s29
      %p43 = scmp.eq.s32.totalorder %s21, 1
      %p44 = por %p42, %p43
      %p46 = scmp.ne.s32.totalorder %s29, %s45
      %p47 = scmp.eq.s32.totalorder %s21, 0
      %p48 = por %p46, %p47
      %s50 = sadd.s32 %s49, 1
      %p53 = scmp.eq.s32.totalorder %s15, 1
      %p54 = scmp.ne.s32.totalorder %s49, %s51
      %p55 = scmp.eq.s32.totalorder %s15, 0
      %p56 = por %p54, %p55
      %p57 = scmp.ne.s32.totalorder %s49, %s51
      %p58 = scmp.eq.s32.totalorder %s20, 1
      %p59 = por %p57, %p58
      %p60 = scmp.ne.s32.totalorder %s51, %s52
      %p61 = scmp.eq.s32.totalorder %s20, 0
      %p62 = por %p60, %p61
      %p63 = scmp.ne.s32.totalorder %s51, %s52
      %p64 = scmp.eq.s32.totalorder %s21, 1
      %p65 = por %p63, %p64
      %p67 = scmp.ne.s32.totalorder %s52, %s66
      %p68 = scmp.eq.s32.totalorder %s21, 0
      %p69 = por %p67, %p68
      %s71 = sadd.s32 %s70, 1
      %p74 = scmp.eq.s32.totalorder %s15, 1
      %p75 = scmp.ne.s32.totalorder %s70, %s72
      %p76 = scmp.eq.s32.totalorder %s15, 0
      %p77 = por %p75, %p76
      %p78 = scmp.ne.s32.totalorder %s70, %s72
      %p79 = scmp.eq.s32.totalorder %s20, 1
      %p80 = por %p78, %p79
      %p81 = scmp.ne.s32.totalorder %s72, %s73
      %p82 = scmp.eq.s32.totalorder %s20, 0
      %p83 = por %p81, %p82
      %p84 = scmp.ne.s32.totalorder %s72, %s73
      %p85 = scmp.eq.s32.totalorder %s21, 1
      %p86 = por %p84, %p85
      %p88 = scmp.ne.s32.totalorder %s73, %s87
      %p89 = scmp.eq.s32.totalorder %s21, 0
      %p90 = por %p88, %p89
      %s92 = sadd.s32 %s91, 1
      %p95 = scmp.eq.s32.totalorder %s15, 1
      %p96 = scmp.ne.s32.totalorder %s91, %s93
      %p97 = scmp.eq.s32.totalorder %s15, 0
      %p98 = por %p96, %p97
      %p99 = scmp.ne.s32.totalorder %s91, %s93
      %p100 = scmp.eq.s32.totalorder %s20, 1
      %p101 = por %p99, %p100
      %p102 = scmp.ne.s32.totalorder %s93, %s94
      %p103 = scmp.eq.s32.totalorder %s20, 0
      %p104 = por %p102, %p103
      %p105 = scmp.ne.s32.totalorder %s93, %s94
      %p106 = scmp.eq.s32.totalorder %s21, 1
      %p107 = por %p105, %p106
      %p109 = scmp.ne.s32.totalorder %s94, %s108
      %p110 = scmp.eq.s32.totalorder %s21, 0
      %p111 = por %p109, %p110
      %s113 = sadd.s32 %s112, 1
      %p116 = scmp.eq.s32.totalorder %s15, 1
      %p117 = scmp.ne.s32.totalorder %s112, %s114
      %p118 = scmp.eq.s32.totalorder %s15, 0
      %p119 = por %p117, %p118
      %p120 = scmp.ne.s32.totalorder %s112, %s114
      %p121 = scmp.eq.s32.totalorder %s20, 1
      %p122 = por %p120, %p121
      %p123 = scmp.ne.s32.totalorder %s114, %s115
      %p124 = scmp.eq.s32.totalorder %s20, 0
      %p125 = por %p123, %p124
      %p126 = scmp.ne.s32.totalorder %s114, %s115
      %p127 = scmp.eq.s32.totalorder %s21, 1
      %p128 = por %p126, %p127
      %p130 = scmp.ne.s32.totalorder %s115, %s129
      %p131 = scmp.eq.s32.totalorder %s21, 0
      %p132 = por %p130, %p131
      %s133 = ssub.s32 %s15, %s22
      %p134 = scmp.eq.s32.totalorder %s133, 0
      %s136 = sadd.s32 %s135, 1
      %s137 = scalar_select %p134, %s135, %s136
      %p140 = pneg %p134
      %p141 = scmp.eq.s32.totalorder %s15, 1
      %p142 = por %p140, %p141
      %p143 = scmp.ne.s32.totalorder %s135, %s138
      %p144 = scmp.eq.s32.totalorder %s15, 0
      %p145 = por %p143, %p144
      %p146 = scmp.ne.s32.totalorder %s135, %s138
      %p147 = scmp.eq.s32.totalorder %s20, 1
      %p148 = por %p146, %p147
      %p149 = scmp.ne.s32.totalorder %s138, %s139
      %p150 = scmp.eq.s32.totalorder %s20, 0
      %p151 = por %p149, %p150
      %p152 = scmp.ne.s32.totalorder %s138, %s139
      %p153 = scmp.eq.s32.totalorder %s21, 1
      %p154 = por %p152, %p153
      %p156 = scmp.ne.s32.totalorder %s139, %s155
      %p157 = scmp.eq.s32.totalorder %s21, 0
      %p158 = por %p156, %p157
      %p159 = scmp.le.s32.totalorder 1, %s15
      %p160 = scmp.lt.s32.totalorder %s15, 3
      %p161 = pnand %p159, %p160
      %p162 = pneg %p161
      // Predicated region
      $region9: #{tpu_custom_call.1} parent=5 // pred_check
        _
      $region10: #{tpu_custom_call.1} parent=5 // pred_check_branch
        %164 = sbr.rel (%p161) target = $region12
      $region11: #{tpu_custom_call.1} parent=5 // pred_region
        %s165 = ssub.s32 %s15, 1
        // Predicated region
        $region13: #{tpu_custom_call.1} parent=11 // pred_check
          %p166 = pneg %p62
        $region14: #{tpu_custom_call.1} parent=11 // pred_check_branch
          %168 = sbr.rel (%p166) target = $region16
        $region15: #{tpu_custom_call.1} parent=11 // pred_region
          _
        $region16: #{tpu_custom_call.1} parent=11 // pred_fallthru
          _
        // Predicated region
        $region17: #{tpu_custom_call.1} parent=11 // pred_check
          %p169 = pneg %p83
        $region18: #{tpu_custom_call.1} parent=11 // pred_check_branch
          %171 = sbr.rel (%p169) target = $region20
        $region19: #{tpu_custom_call.1} parent=11 // pred_region
          _
        $region20: #{tpu_custom_call.1} parent=11 // pred_fallthru
          _
        // Predicated region
        $region21: #{tpu_custom_call.1} parent=11 // pred_check
          %p172 = pneg %p104
        $region22: #{tpu_custom_call.1} parent=11 // pred_check_branch
          %174 = sbr.rel (%p172) target = $region24
        $region23: #{tpu_custom_call.1} parent=11 // pred_region
          %176 = vsyncadd [#allocation5], 0
          %s177 = sshll.u32 %s3, 4
          %s178 = int_to_ptr.hbm [resolvable:$true] %s177
          %s179 = sshll.u32 [#allocation4], 4
          %s180 = int_to_ptr.vmem [resolvable:$true] %s179
          %185 = dma.hbm_to_vmem [thread:$0]  %s178, 1536, %s180, [#allocation5], 64, 64, 4
        $region24: #{tpu_custom_call.1} parent=11 // pred_fallthru
          _
        // Predicated region
        $region25: #{tpu_custom_call.1} parent=11 // pred_check
          %p186 = pneg %p125
        $region26: #{tpu_custom_call.1} parent=11 // pred_check_branch
          %188 = sbr.rel (%p186) target = $region28
        $region27: #{tpu_custom_call.1} parent=11 // pred_region
          _
        $region28: #{tpu_custom_call.1} parent=11 // pred_fallthru
          _
      $region12: #{tpu_custom_call.1} parent=5 // pred_fallthru
        _
      %p189 = scmp.lt.s32.totalorder %s15, 2
      // Predicated region
      $region29: #{tpu_custom_call.1} parent=5 // pred_check
        %p190 = pneg %p189
      $region30: #{tpu_custom_call.1} parent=5 // pred_check_branch
        %192 = sbr.rel (%p190) target = $region32
      $region31: #{tpu_custom_call.1} parent=5 // pred_region
        // Predicated region
        $region33: #{tpu_custom_call.1} parent=31 // pred_check
          %p193 = pneg %p35
        $region34: #{tpu_custom_call.1} parent=31 // pred_check_branch
          %195 = sbr.rel (%p193) target = $region36
        $region35: #{tpu_custom_call.1} parent=31 // pred_region
          %p196 = scmp.lt.s32.totalorder %s15, 1
          %s197 = scalar_select %p196, %s15, 1
          %s198 = smul.addr %s197, 8
          %s199 = scalar_lea.vmem %s0, %s198
        $region36: #{tpu_custom_call.1} parent=31 // pred_fallthru
          _
      $region32: #{tpu_custom_call.1} parent=5 // pred_fallthru
        _
      %p200 = scmp.le.s32.totalorder 1, %s15
      %p201 = scmp.lt.s32.totalorder %s15, 3
      %p202 = pnand %p200, %p201
      %p203 = pneg %p202
      // Predicated region
      $region37: #{tpu_custom_call.1} parent=5 // pred_check
        _
      $region38: #{tpu_custom_call.1} parent=5 // pred_check_branch
        %205 = sbr.rel (%p202) target = $region40
      $region39: #{tpu_custom_call.1} parent=5 // pred_region
        %s206 = ssub.s32 %s15, 1
        // Predicated region
        $region41: #{tpu_custom_call.1} parent=39 // pred_check
          %p207 = pneg %p104
        $region42: #{tpu_custom_call.1} parent=39 // pred_check_branch
          %209 = sbr.rel (%p207) target = $region44
        $region43: #{tpu_custom_call.1} parent=39 // pred_region
          %211 = dma.done [#allocation5], 1536
        $region44: #{tpu_custom_call.1} parent=39 // pred_fallthru
          _
        %p212 = scmp.lt.s32.totalorder %s20, 1
        %s213 = scalar_select %p212, %s20, 1
        %s214 = smul.addr %s213, 8
        %s215 = scalar_lea.vmem %s0, %s214
        %p216 = pneg %p41
        %p217 = pneg %p38
        %p218 = pneg %p62
        %p219 = pneg %p59
        %p220 = pneg %p83
        %p221 = pneg %p80
        %p222 = pneg %p104
        %p223 = pneg %p101
        %p224 = pneg %p125
        %p225 = pneg %p122
        %p226 = pneg %p151
        %p227 = pneg %p148
        %s228 = sand.u32 %s138, 1
        %s229 = scalar_lea.sflag [#allocation6], %s228
        %s230 = sand.u32 %s138, 1
        %s231 = smul.addr %s230, 8
        %s232 = scalar_lea.vmem [#allocation7], %s231
        %p233 = scmp.lt.s32.totalorder %s20, 1
        %s234 = scalar_select %p233, %s20, 1
        %s235 = smul.addr %s234, 8
        %s236 = scalar_lea.vmem %s0, %s235
        %v238 = vld [vmem:[%s236] sm:$0xff]
        %vm239 = vcmask 97280
        %240 = vst.msk [vmem:[#allocation2] sm:$0xff] %vm239, 0.0
        %vm241 = vcmask 30720
        %242 = vst.msk [vmem:[#allocation2 + $0x1] sm:$0x7f] %vm241, %v238
        %244 = vrot.lane.b32.xlu0 %v238, 4
        %v245 = vpop.permute.xlu0 %244
        %vm247 = vcmask 64544
        %248 = vst.msk [vmem:[#allocation2] sm:$0xff] %vm247, %v245
        %249 = vrot.lane.b32.xlu0 %v238, 8
        %v250 = vpop.permute.xlu0 %249
        %vm252 = vcmask 97345
        %253 = vst.msk [vmem:[#allocation2 - $0x1] sm:$0xfe] %vm252, %v250
        %v254 = vld [vmem:[#allocation2] sm:$0xff]
        %v255 = vpack.c.bf16 %v254, %v254
        %v256 = vld [vmem:[%s1] sm:$0xf]
        %v257 = vld [vmem:[%s1 + $0x4] sm:$0x3]
        %v258 = vld [vmem:[%s2] sm:$0x1]
        %v260 = vperm.slane %v258, 0
        %v264 = vunpack.c.l.b16 %v256
        %v265 = vunpack.c.l.b16 %v257
        %v266 = vpack.c.b16 %v265, %v264
        %v268 = vsel %vm239, %v255, 0
        %vm270 = vcmask 1045504
        %v272 = vsel %vm270, %v266, 0
        %274 = vmatpush.bf16.msra.mxu0 0
        %275 = vmatpush.bf16.msra.mxu0 0
        %276 = vmatpush.bf16.msra.mxu0 0
        %277 = vmatpush.bf16.msra.mxu0 0
        %278 = vmatpush.bf16.msra.mxu0 0
        %279 = vmatpush.bf16.msra.mxu0 0
        %280 = vmatpush.bf16.msra.mxu0 0
        %281 = vmatpush.bf16.msra.mxu0 %v272
        %282 = vmatmul.bf16.gmra.mxu0 %v268
        %v283 = vpop.f32.mrf.mxu0
        %v284 = vadd.f32 %v260, %v283
        %v285 = vpop.f32.mrf.mxu0
        %286 = vdwg.mxu0
        %v287 = vmax.f32 %v284, 0.0
        %288 = vst [vmem:[#allocation3] sm:$0xff] 0.0
        %vm289 = vcmask 523264
        %290 = vst.msk [vmem:[#allocation3 + $0x8] sm:$0xff] %vm289, 0.0
        %v292 = vrot.slane %v287, 7
        %vm294 = vcmask 523265
        %295 = vst.msk [vmem:[#allocation3] sm:$0xfe] %vm294, %v292
        %296 = vrot.lane.b32.xlu0 %v287, 64
        %v297 = vpop.permute.xlu0 %296
        %vm299 = vcmask 1048064
        %300 = vst.msk [vmem:[#allocation3] sm:$0xff] %vm299, %v297
        %v301 = vrot.slane %v287, 1
        %vm303 = vcmask 522240
        %304 = vst.msk [vmem:[#allocation3 + $0x8] sm:$0x7f] %vm303, %v301
        %v305 = vld [vmem:[#allocation3] sm:$0xff]
        %v306 = vld [vmem:[#allocation3 + $0x8] sm:$0xff]
        %v307 = vpack.c.bf16 %v305, %v305
        %v308 = vpack.c.bf16 %v306, %v306
        %v309 = vld [vmem:[#allocation4] sm:$0xf]
        %v310 = vld [vmem:[#allocation4 + $0x4] sm:$0xf]
        %v311 = vld [vmem:[#allocation4 + $0x8] sm:$0xf]
        %v312 = vld [vmem:[#allocation4 + $0xc] sm:$0xf]
        %v313 = vld [vmem:[#allocation4 + $0x10] sm:$0xf]
        %v314 = vld [vmem:[#allocation4 + $0x14] sm:$0xf]
        %v315 = vld [vmem:[#allocation4 + $0x18] sm:$0xf]
        %v316 = vld [vmem:[#allocation4 + $0x1c] sm:$0xf]
        %v317 = vld [vmem:[#allocation4 + $0x20] sm:$0xf]
        %v318 = vld [vmem:[#allocation4 + $0x24] sm:$0xf]
        %v319 = vld [vmem:[#allocation4 + $0x28] sm:$0xf]
        %v320 = vld [vmem:[#allocation4 + $0x2c] sm:$0xf]
        %v321 = vld [vmem:[#allocation4 + $0x30] sm:$0xf]
        %v322 = vld [vmem:[#allocation4 + $0x34] sm:$0xf]
        %v323 = vld [vmem:[#allocation4 + $0x38] sm:$0xf]
        %v324 = vld [vmem:[#allocation4 + $0x3c] sm:$0xf]
        %v325 = vld [vmem:[#allocation4 + $0x40] sm:$0xf]
        %v326 = vld [vmem:[#allocation4 + $0x44] sm:$0xf]
        %v327 = vld [vmem:[#allocation4 + $0x48] sm:$0xf]
        %v328 = vld [vmem:[#allocation4 + $0x4c] sm:$0xf]
        %v329 = vld [vmem:[#allocation4 + $0x50] sm:$0xf]
        %v330 = vld [vmem:[#allocation4 + $0x54] sm:$0xf]
        %v331 = vld [vmem:[#allocation4 + $0x58] sm:$0xf]
        %v332 = vld [vmem:[#allocation4 + $0x5c] sm:$0xf]
        %v333 = vld [vmem:[%s4] sm:$0x1]
        %v335 = vperm.slane %v333, 0
        %v361 = vunpack.c.l.b16 %v309
        %v362 = vunpack.c.l.b16 %v310
        %v363 = vunpack.c.l.b16 %v311
        %v364 = vunpack.c.l.b16 %v312
        %v365 = vunpack.c.l.b16 %v313
        %v366 = vunpack.c.l.b16 %v314
        %v367 = vunpack.c.l.b16 %v315
        %v368 = vunpack.c.l.b16 %v316
        %v369 = vunpack.c.l.b16 %v317
        %v370 = vunpack.c.l.b16 %v318
        %v371 = vunpack.c.l.b16 %v319
        %v372 = vunpack.c.l.b16 %v320
        %v373 = vunpack.c.l.b16 %v321
        %v374 = vunpack.c.l.b16 %v322
        %v375 = vunpack.c.l.b16 %v323
        %v376 = vunpack.c.l.b16 %v324
        %v377 = vunpack.c.l.b16 %v325
        %v378 = vunpack.c.l.b16 %v326
        %v379 = vunpack.c.l.b16 %v327
        %v380 = vunpack.c.l.b16 %v328
        %v381 = vunpack.c.l.b16 %v329
        %v382 = vunpack.c.l.b16 %v330
        %v383 = vunpack.c.l.b16 %v331
        %v384 = vunpack.c.l.b16 %v332
        %v385 = vpack.c.b16 %v362, %v361
        %v386 = vpack.c.b16 %v364, %v363
        %v387 = vpack.c.b16 %v366, %v365
        %v388 = vpack.c.b16 %v368, %v367
        %v389 = vpack.c.b16 %v370, %v369
        %v390 = vpack.c.b16 %v372, %v371
        %v391 = vpack.c.b16 %v374, %v373
        %v392 = vpack.c.b16 %v376, %v375
        %v393 = vpack.c.b16 %v378, %v377
        %v394 = vpack.c.b16 %v380, %v379
        %v395 = vpack.c.b16 %v382, %v381
        %v396 = vpack.c.b16 %v384, %v383
        %v410 = vsel %vm289, %v308, 0
        %412 = vmatpush.bf16.msra.mxu0 %v392
        %413 = vmatpush.bf16.msra.mxu0 %v391
        %414 = vmatpush.bf16.msra.mxu0 %v390
        %415 = vmatpush.bf16.msra.mxu0 %v389
        %416 = vmatpush.bf16.msra.mxu0 %v388
        %417 = vmatpush.bf16.msra.mxu0 %v387
        %418 = vmatpush.bf16.msra.mxu0 %v386
        %419 = vmatpush.bf16.msra.mxu0 %v385
        %420 = vmatmul.bf16.gmra.mxu0 %v307
        %v421 = vpop.f32.mrf.mxu0
        %v422 = vadd.f32 %v335, %v421
        %v423 = vpop.f32.mrf.mxu0
        %424 = vdwg.mxu0
        %425 = vmatpush.bf16.msra.mxu0 0
        %426 = vmatpush.bf16.msra.mxu0 0
        %427 = vmatpush.bf16.msra.mxu0 0
        %428 = vmatpush.bf16.msra.mxu0 0
        %429 = vmatpush.bf16.msra.mxu0 %v396
        %430 = vmatpush.bf16.msra.mxu0 %v395
        %431 = vmatpush.bf16.msra.mxu0 %v394
        %432 = vmatpush.bf16.msra.mxu0 %v393
        %433 = vmatmul.bf16.gmra.mxu0 %v410
        %v434 = vpop.f32.mrf.mxu0
        %v435 = vadd.f32 %v422, %v434
        %v436 = vpop.f32.mrf.mxu0
        %437 = vdwg.mxu0
        %v438 = vmax.f32 %v435, 0.0
        %439 = vst [vmem:[%s232] sm:$0xff] %v438
        %s440 = sand.u32 %s138, 1
        %s441 = scalar_lea.sflag [#allocation6], %s440
        %s442 = sand.u32 %s138, 1
        %s443 = smul.addr %s442, 8
        %s444 = scalar_lea.vmem [#allocation7], %s443
        // Predicated region
        $region45: #{tpu_custom_call.1} parent=39 // pred_check
          %p445 = pneg %p148
        $region46: #{tpu_custom_call.1} parent=39 // pred_check_branch
          %447 = sbr.rel (%p445) target = $region48
        $region47: #{tpu_custom_call.1} parent=39 // pred_region
          %449 = vsyncadd %s441, 0
          %s450 = smul.addr %s20, 8
          %s451 = scalar_lea.hbm %s5, %s450
          %s453 = sshll.u32 %s444, 4
          %s454 = int_to_ptr.vmem [resolvable:$true] %s453
          %s455 = sshll.u32 %s451, 4
          %s456 = int_to_ptr.hbm [resolvable:$true] %s455
          %458 = dma.vmem_to_hbm [thread:$0]  %s454, 128, %s456, %s441
        $region48: #{tpu_custom_call.1} parent=39 // pred_fallthru
          _
      $region40: #{tpu_custom_call.1} parent=5 // pred_fallthru
        _
      %p459 = scmp.le.s32.totalorder 2, %s15
      // Predicated region
      $region49: #{tpu_custom_call.1} parent=5 // pred_check
        %p460 = pneg %p459
      $region50: #{tpu_custom_call.1} parent=5 // pred_check_branch
        %462 = sbr.rel (%p460) target = $region52
      $region51: #{tpu_custom_call.1} parent=5 // pred_region
        %s463 = ssub.s32 %s15, 2
        // Predicated region
        $region53: #{tpu_custom_call.1} parent=51 // pred_check
          %p464 = pneg %p154
        $region54: #{tpu_custom_call.1} parent=51 // pred_check_branch
          %466 = sbr.rel (%p464) target = $region56
        $region55: #{tpu_custom_call.1} parent=51 // pred_region
          %s467 = sand.u32 %s139, 1
          %s468 = scalar_lea.sflag [#allocation6], %s467
          %s469 = sand.u32 %s139, 1
          %s470 = smul.addr %s469, 8
          %s471 = scalar_lea.vmem [#allocation7], %s470
          %473 = dma.done %s468, 128
        $region56: #{tpu_custom_call.1} parent=51 // pred_fallthru
          _
      $region52: #{tpu_custom_call.1} parent=5 // pred_fallthru
        _
    $region6: #{tpu_custom_call.1} parent=1 // loop_footer
      %s19 = sadd.s32 1, %s15
    $region7: #{tpu_custom_call.1} parent=1 // loop_footer_branch
      %14 = sbr.rel target = $region3
    $region8: #{tpu_custom_call.1} parent=1 // loop_exit
      _
    %474 = vsyncpa [#allocation5], 1
    %s475 = scalar_lea.sflag [#allocation5], 1
    %476 = vsyncpa %s475, 1
    %477 = vsyncpa [#allocation6], 1
    %s478 = scalar_lea.sflag [#allocation6], 1
    %479 = vsyncpa %s478, 1

</llo_original>
